<compile_context>
chip_gen: v5e
topology: v5e:2x2
jax: 0.10.0
libtpu: 0.0.40
codegen_flags: <defaults>
</compile_context>

<pallas_src>
import functools

import numpy as np
import jax
import jax.numpy as jnp
from jax.experimental import pallas as pl
from jax.experimental.pallas import tpu as pltpu

ATOM_FDIM = 39
BOND_FDIM = 11            # fbonds feature dim = ATOM_FDIM + BOND_FDIM = 50
FPAD = 128                # lane-padded atom/bond feature width
HPAD = 128                # lane-padded MPNN hidden width (mpnn_hidden_size <= 128)
MPNN_GROUP = 8            # molecules per MPNN grid step
VMEM_LIMIT_BYTES = 48 * 1024 * 1024


def _round_up(x, m):
    return ((x + m - 1) // m) * m


# ---------------------------------------------------------------------------
# MPNN kernel: G molecules per grid step, precomputed per-molecule adjacency,
# bf16 matmul operands, masked per-molecule mean.
# ---------------------------------------------------------------------------
def _mpnn_kernel(ab_ref,                        # SMEM (B_pad, 2) scalar-prefetch
                 fatoms_ref, fbonds_ref, adja_ref, adjb_ref,
                 wi_ref, wh_ref, woa_ref, won_ref, bo_ref,
                 out_ref, *, depth, group):
    G = group
    g0 = pl.program_id(0) * G
    A = fatoms_ref.shape[1]
    NB = fbonds_ref.shape[1]

    # Stack all bonds of the group along the sublane axis: one big W_i matmul.
    fbonds = jnp.concatenate([fbonds_ref[j] for j in range(G)], axis=0)   # (G*NB, F) bf16
    binput = jnp.dot(fbonds, wi_ref[...], preferred_element_type=jnp.float32)
    message = jnp.maximum(binput, 0.0)                                    # (G*NB, H) f32

    for _ in range(depth - 1):
        msg_b = message.astype(jnp.bfloat16)
        # index_select_ND(message, 0, bgraph).sum(1) == adj_b @ message (per molecule).
        nei = jnp.concatenate(
            [jnp.dot(adjb_ref[j], msg_b[j * NB:(j + 1) * NB, :],
                     preferred_element_type=jnp.float32)
             for j in range(G)], axis=0)                                  # (G*NB, H) f32
        nei = jnp.dot(nei.astype(jnp.bfloat16), wh_ref[...],
                      preferred_element_type=jnp.float32)
        message = jnp.maximum(binput + nei, 0.0)

    msg_b = message.astype(jnp.bfloat16)
    nei_a = jnp.concatenate(
        [jnp.dot(adja_ref[j], msg_b[j * NB:(j + 1) * NB, :],
                 preferred_element_type=jnp.float32)
         for j in range(G)], axis=0)                                      # (G*A, H) f32
    fatoms = jnp.concatenate([fatoms_ref[j] for j in range(G)], axis=0)   # (G*A, F) bf16

    # relu(W_o(cat([fatoms, nei_a]))) == relu(fatoms @ Wo[:39] + nei_a @ Wo[39:] + b)
    atom_h = (jnp.dot(fatoms, woa_ref[...], preferred_element_type=jnp.float32)
              + jnp.dot(nei_a.astype(jnp.bfloat16), won_ref[...],
                        preferred_element_type=jnp.float32)
              + bo_ref[...])
    atom_h = jnp.maximum(atom_h, 0.0)                                     # (G*A, H) f32

    # Mean over the real atoms only (padded rows masked out); n_a == 0 -> zeros.
    row = jax.lax.broadcasted_iota(jnp.int32, (A, 1), 0)
    outs = []
    for j in range(G):
        n_a = ab_ref[g0 + j, 0]
        mask = (row < n_a).astype(jnp.float32)
        denom = jnp.maximum(n_a, 1).astype(jnp.float32)
        outs.append(jnp.sum(atom_h[j * A:(j + 1) * A, :] * mask,
                            axis=0, keepdims=True) * (1.0 / denom))
    out_ref[...] = jnp.concatenate(outs, axis=0)                          # (G, HPAD)


def mpnn_batched(ab, fatoms_b, fbonds_b, adja_b, adjb_b, params, depth, group):
    B_pad, A, _ = fatoms_b.shape
    NB = fbonds_b.shape[1]
    n_groups = B_pad // group
    grid_spec = pltpu.PrefetchScalarGridSpec(
        num_scalar_prefetch=1,
        grid=(n_groups,),
        in_specs=[
            pl.BlockSpec((group, A, FPAD), lambda g, ab: (g, 0, 0)),
            pl.BlockSpec((group, NB, FPAD), lambda g, ab: (g, 0, 0)),
            pl.BlockSpec((group, A, NB), lambda g, ab: (g, 0, 0)),
            pl.BlockSpec((group, NB, NB), lambda g, ab: (g, 0, 0)),
            pl.BlockSpec((FPAD, HPAD), lambda g, ab: (0, 0)),
            pl.BlockSpec((HPAD, HPAD), lambda g, ab: (0, 0)),
            pl.BlockSpec((FPAD, HPAD), lambda g, ab: (0, 0)),
            pl.BlockSpec((HPAD, HPAD), lambda g, ab: (0, 0)),
            pl.BlockSpec((1, HPAD), lambda g, ab: (0, 0)),
        ],
        out_specs=pl.BlockSpec((group, HPAD), lambda g, ab: (g, 0)),
    )
    out = pl.pallas_call(
        functools.partial(_mpnn_kernel, depth=depth, group=group),
        out_shape=jax.ShapeDtypeStruct((B_pad, HPAD), jnp.float32),
        grid_spec=grid_spec,
        compiler_params=pltpu.CompilerParams(
            dimension_semantics=("parallel",),
            vmem_limit_bytes=VMEM_LIMIT_BYTES),
    )(ab, fatoms_b, fbonds_b, adja_b, adjb_b,
      params["W_i"], params["W_h"], params["W_o_atom"], params["W_o_nei"],
      params["b_o"])
    return out                                  # (B_pad, HPAD) f32, cols >= H are zero


# ---------------------------------------------------------------------------
# Conv1d (+ReLU) as K accumulating per-tap matmuls over an L tile; the last
# layer keeps a running max (adaptive_max_pool1d output_size=1) in the
# resident output block.
# ---------------------------------------------------------------------------
def _conv_kernel(x_ref, w_ref, b_ref, o_ref, *, K, TL, L_valid):
    t = pl.program_id(1)
    x = x_ref[0, 0]                                         # (TL+2*pad, Cin) bf16
    Cout = o_ref.shape[-1]
    acc = jnp.zeros((TL, Cout), jnp.float32)
    for k in range(K):
        acc = acc + jnp.dot(x[k:k + TL, :], w_ref[k],
                            preferred_element_type=jnp.float32)
    y = jnp.maximum(acc + b_ref[...], 0.0)
    row = t * TL + jax.lax.broadcasted_iota(jnp.int32, (TL, 1), 0)
    y = jnp.where(row < L_valid, y, 0.0)                    # keep padded rows at zero
    o_ref[0, 0] = y.astype(o_ref.dtype)


def _conv_pool_kernel(x_ref, w_ref, b_ref, o_ref, *, K, TL, L_valid):
    t = pl.program_id(1)

    @pl.when(t == 0)
    def _init():
        o_ref[...] = jnp.zeros_like(o_ref)                  # relu outputs >= 0

    x = x_ref[0, 0]
    Cout = o_ref.shape[-1]
    acc = jnp.zeros((TL, Cout), jnp.float32)
    for k in range(K):
        acc = acc + jnp.dot(x[k:k + TL, :], w_ref[k],
                            preferred_element_type=jnp.float32)
    y = jnp.maximum(acc + b_ref[...], 0.0)
    row = t * TL + jax.lax.broadcasted_iota(jnp.int32, (TL, 1), 0)
    y = jnp.where(row < L_valid, y, 0.0)                    # 0 is a safe identity: y >= 0
    o_ref[0] = jnp.maximum(o_ref[0], jnp.max(y, axis=0, keepdims=True))


def conv1d_relu_pallas(x, w, b, L_valid, pool):
    # x: (B, Lc, Cin) bf16 channels-last, rows >= L_valid are zero.
    # w: (K, Cin, Cout) bf16; b: (1, Cout) f32.
    B, Lc, Cin = x.shape
    K, _, Cout = w.shape
    pad = K // 2                                            # matches Conv1d(padding=int(K/2))
    TL = min(512, _round_up(L_valid, 8))
    n_lt = -(-L_valid // TL)
    Lw = n_lt * TL
    if Lc > Lw:
        x = x[:, :Lw, :]                                    # rows >= L_valid are zero anyway
        Lc = Lw
    xp = jnp.pad(x, ((0, 0), (pad, Lw + pad - Lc), (0, 0)))
    # Overlapping L tiles with a pad-sized halo (~1x copy, NOT the Kx im2col).
    tiles = jnp.stack([xp[:, t * TL:t * TL + TL + 2 * pad, :] for t in range(n_lt)],
                      axis=1)                               # (B, n_lt, TL+2*pad, Cin)

    in_specs = [
        pl.BlockSpec((1, 1, TL + 2 * pad, Cin), lambda i, t: (i, t, 0, 0)),
        pl.BlockSpec((K, Cin, Cout), lambda i, t: (0, 0, 0)),
        pl.BlockSpec((1, Cout), lambda i, t: (0, 0)),
    ]
    if pool:
        out = pl.pallas_call(
            functools.partial(_conv_pool_kernel, K=K, TL=TL, L_valid=L_valid),
            out_shape=jax.ShapeDtypeStruct((B, 1, Cout), jnp.float32),
            grid=(B, n_lt),
            in_specs=in_specs,
            out_specs=pl.BlockSpec((1, 1, Cout), lambda i, t: (i, 0, 0)),
            compiler_params=pltpu.CompilerParams(
                dimension_semantics=("parallel", "arbitrary"),
                vmem_limit_bytes=VMEM_LIMIT_BYTES),
        )(tiles, w, b)
        return out.reshape(B, Cout)
    out = pl.pallas_call(
        functools.partial(_conv_kernel, K=K, TL=TL, L_valid=L_valid),
        out_shape=jax.ShapeDtypeStruct((B, n_lt, TL, Cout), jnp.bfloat16),
        grid=(B, n_lt),
        in_specs=in_specs,
        out_specs=pl.BlockSpec((1, 1, TL, Cout), lambda i, t: (i, t, 0, 0)),
        compiler_params=pltpu.CompilerParams(
            dimension_semantics=("parallel", "parallel"),
            vmem_limit_bytes=VMEM_LIMIT_BYTES),
    )(tiles, w, b)
    return out.reshape(B, n_lt * TL, Cout)


# ---------------------------------------------------------------------------
# Head kernel: concat(embed, pooled-protein) + FC chain, tiled over B rows.
# ---------------------------------------------------------------------------
def _head_kernel(embed_ref, prot_ref, w1a_ref, w1b_ref, b1_ref,
                 w2_ref, b2_ref, w3_ref, b3_ref, out_ref):
    e = embed_ref[...].astype(jnp.bfloat16)
    p = prot_ref[...].astype(jnp.bfloat16)
    # fc1(cat([embed, prot])) == embed @ W1[:H] + prot @ W1[H:] + b1
    x = (jnp.dot(e, w1a_ref[...], preferred_element_type=jnp.float32)
         + jnp.dot(p, w1b_ref[...], preferred_element_type=jnp.float32)
         + b1_ref[...])
    x = jnp.dot(x.astype(jnp.bfloat16), w2_ref[...],
                preferred_element_type=jnp.float32) + b2_ref[...]
    x = jnp.dot(x.astype(jnp.bfloat16), w3_ref[...],
                preferred_element_type=jnp.float32) + b3_ref[...]
    out_ref[...] = x


def head_forward(embeddings, prot_pooled, params):
    B, Hd = embeddings.shape
    CP = prot_pooled.shape[1]
    TB = 128 if B >= 128 else _round_up(B, 8)
    Bp = _round_up(B, TB)
    emb = jnp.zeros((Bp, Hd), embeddings.dtype).at[:B].set(embeddings)
    prot = jnp.zeros((Bp, CP), prot_pooled.dtype).at[:B].set(prot_pooled)
    H1 = params["fc_w1a"].shape[1]
    H2 = params["fc_w2"].shape[1]
    H3 = params["fc_w3"].shape[1]
    out = pl.pallas_call(
        _head_kernel,
        out_shape=jax.ShapeDtypeStruct((Bp, H3), jnp.float32),
        grid=(Bp // TB,),
        in_specs=[
            pl.BlockSpec((TB, Hd), lambda i: (i, 0)),
            pl.BlockSpec((TB, CP), lambda i: (i, 0)),
            pl.BlockSpec((Hd, H1), lambda i: (0, 0)),
            pl.BlockSpec((CP, H1), lambda i: (0, 0)),
            pl.BlockSpec((1, H1), lambda i: (0, 0)),
            pl.BlockSpec((H1, H2), lambda i: (0, 0)),
            pl.BlockSpec((1, H2), lambda i: (0, 0)),
            pl.BlockSpec((H2, H3), lambda i: (0, 0)),
            pl.BlockSpec((1, H3), lambda i: (0, 0)),
        ],
        out_specs=pl.BlockSpec((TB, H3), lambda i: (i, 0)),
        compiler_params=pltpu.CompilerParams(
            dimension_semantics=("parallel",),
            vmem_limit_bytes=VMEM_LIMIT_BYTES),
    )(emb, prot,
      params["fc_w1a"], params["fc_w1b"], params["fc_b1"],
      params["fc_w2"], params["fc_b2"],
      params["fc_w3"], params["fc_b3"])
    return out[:B]


# ---------------------------------------------------------------------------
# Parameters (deterministic init, lane-padded, bf16 matmul operands)
# ---------------------------------------------------------------------------
def init_params(key, mpnn_hidden_size, protein_size):
    H = mpnn_hidden_size
    assert H <= HPAD
    ks = jax.random.split(key, 20)

    def lin(k, fan_in, shape):
        return jax.random.normal(k, shape, jnp.float32) / jnp.sqrt(jnp.float32(fan_in))

    def pad2(w, rows, cols):
        out = jnp.zeros((rows, cols), jnp.float32)
        return out.at[:w.shape[0], :w.shape[1]].set(w)

    params = {}
    # Protein embedding table, lane-padded 50 -> 128 (bf16 conv input).
    params["embed_protein"] = pad2(lin(ks[0], 1.0, (protein_size, 50)),
                                   protein_size, FPAD).astype(jnp.bfloat16)

    kernals = [3, 5, 7]
    filt = [50, 96, 128, 200]
    filt_pad = [FPAD, 128, 128, 256]
    convs = []
    for i in range(3):
        K, Cin, Cout = kernals[i], filt[i], filt[i + 1]
        Cin_p, Cout_p = filt_pad[i], filt_pad[i + 1]
        w = lin(ks[1 + i], Cin * K, (K, Cin, Cout))
        wp = jnp.zeros((K, Cin_p, Cout_p), jnp.float32).at[:, :Cin, :Cout].set(w)
        b = pad2(lin(ks[4 + i], Cin * K, (1, Cout)), 1, Cout_p)
        convs.append((wp.astype(jnp.bfloat16), b))
    params["target_cnn"] = convs

    params["W_i"] = pad2(lin(ks[7], ATOM_FDIM + BOND_FDIM,
                             (ATOM_FDIM + BOND_FDIM, H)), FPAD, HPAD).astype(jnp.bfloat16)
    params["W_h"] = pad2(lin(ks[8], H, (H, H)), HPAD, HPAD).astype(jnp.bfloat16)
    wo = lin(ks[9], ATOM_FDIM + H, (ATOM_FDIM + H, H))
    params["W_o_atom"] = pad2(wo[:ATOM_FDIM], FPAD, HPAD).astype(jnp.bfloat16)
    params["W_o_nei"] = pad2(wo[ATOM_FDIM:], HPAD, HPAD).astype(jnp.bfloat16)
    params["b_o"] = pad2(lin(ks[10], ATOM_FDIM + H, (1, H)), 1, HPAD)      # f32

    in_dim = H + 200
    params["fc_w1a"] = pad2(lin(ks[11], in_dim, (H, 400)), HPAD, 512).astype(jnp.bfloat16)
    params["fc_w1b"] = pad2(lin(ks[12], in_dim, (200, 400)), 256, 512).astype(jnp.bfloat16)
    params["fc_b1"] = pad2(lin(ks[13], in_dim, (1, 400)), 1, 512)
    params["fc_w2"] = pad2(lin(ks[14], 400, (400, 200)), 512, 256).astype(jnp.bfloat16)
    params["fc_b2"] = pad2(lin(ks[15], 400, (1, 200)), 1, 256)
    params["fc_w3"] = pad2(lin(ks[16], 200, (200, 100)), 256, 128).astype(jnp.bfloat16)
    params["fc_b3"] = pad2(lin(ks[17], 200, (1, 100)), 1, 128)
    params["out_dim"] = 100
    return params


# ---------------------------------------------------------------------------
# Host-side packing of the ragged per-molecule graphs + adjacency precompute
# (one host sync total; adjacency streamed into the kernel as bf16).
# ---------------------------------------------------------------------------
def pack_molecules(fatoms, fbonds, agraph, bgraph, atoms_bonds, group):
    ab = np.asarray(atoms_bonds, dtype=np.int32)
    fatoms_np = np.asarray(fatoms, dtype=np.float32)
    fbonds_np = np.asarray(fbonds, dtype=np.float32)
    agraph_np = np.asarray(agraph, dtype=np.int64)
    bgraph_np = np.asarray(bgraph, dtype=np.int64)

    B = ab.shape[0]
    G = group if B >= group else max(B, 1)
    B_pad = _round_up(max(B, 1), G)
    max_na = max(int(ab[:, 0].max()), 1)
    max_nb = max(int(ab[:, 1].max()), 1)
    A = _round_up(max_na, 8)
    NB = _round_up(max_nb, 8)

    fat = np.zeros((B_pad, A, FPAD), np.float32)
    fbo = np.zeros((B_pad, NB, FPAD), np.float32)
    adja = np.zeros((B_pad, A, NB), np.float32)
    adjb = np.zeros((B_pad, NB, NB), np.float32)
    ab_pad = np.zeros((B_pad, 2), np.int32)
    ab_pad[:B] = ab

    na_off = nb_off = 0
    for i in range(B):
        n_a, n_b = int(ab[i, 0]), int(ab[i, 1])
        if n_a == 0:                                # mirrors the zero-embedding branch
            continue
        fat[i, :n_a, :ATOM_FDIM] = fatoms_np[na_off:na_off + n_a]
        fbo[i, :n_b, :ATOM_FDIM + BOND_FDIM] = fbonds_np[nb_off:nb_off + n_b]
        # TODO(synk): assumes molecule-local neighbor indices (per-molecule
        # featurization then concatenation); re-offset here if indices are global.
        bg = bgraph_np[nb_off:nb_off + n_b]
        r = np.repeat(np.arange(n_b), bg.shape[1]); c = bg.reshape(-1)
        ok = (c >= 0) & (c < NB)
        np.add.at(adjb[i], (r[ok], c[ok]), 1.0)
        ag = agraph_np[na_off:na_off + n_a]
        r = np.repeat(np.arange(n_a), ag.shape[1]); c = ag.reshape(-1)
        ok = (c >= 0) & (c < NB)
        np.add.at(adja[i], (r[ok], c[ok]), 1.0)
        na_off += n_a
        nb_off += n_b

    return (G,
            jnp.asarray(ab_pad),
            jnp.asarray(fat, jnp.bfloat16),
            jnp.asarray(fbo, jnp.bfloat16),
            jnp.asarray(adja, jnp.bfloat16),
            jnp.asarray(adjb, jnp.bfloat16))


# ---------------------------------------------------------------------------
# Full forward (mirrors CPI_MPNN.forward)
# ---------------------------------------------------------------------------
def cpi_mpnn_forward(feature, protein_seq, params, mpnn_hidden_size, mpnn_depth):
    del mpnn_hidden_size  # hidden size is encoded in the (padded) params
    fatoms, fbonds, agraph, bgraph, atoms_bonds = feature
    B = int(np.asarray(atoms_bonds).shape[0])
    G, ab, fat_b, fbo_b, adja_b, adjb_b = pack_molecules(
        fatoms, fbonds, agraph, bgraph, atoms_bonds, MPNN_GROUP)
    embeddings = mpnn_batched(ab, fat_b, fbo_b, adja_b, adjb_b, params,
                              mpnn_depth, G)[:B]                      # (B, 128) f32

    # TODO(synk): embedding gather kept as XLA glue; could be fused into the
    # first conv kernel via scalar-prefetched protein_seq.
    prot = jnp.take(params["embed_protein"], protein_seq, axis=0)     # (B, L, 128) bf16
    L = protein_seq.shape[1]
    convs = params["target_cnn"]
    for li, (w, b) in enumerate(convs):
        prot = conv1d_relu_pallas(prot, w, b, L, pool=(li == len(convs) - 1))
    # prot: (B, 256) f32 -- adaptive_max_pool1d(output_size=1) fused into last conv.

    out = head_forward(embeddings, prot, params)                      # (B, 128) f32
    return out[:, :params["out_dim"]]                                 # (B, 100)


# ---------------------------------------------------------------------------
if __name__ == "__main__":
    mpnn_hidden_size = 32
    mpnn_depth = 3
    protein_size = 25
    B = 2            # batch of molecules / proteins
    L = 16           # protein sequence length

    params = init_params(jax.random.PRNGKey(0), mpnn_hidden_size, protein_size)

    # Build the `feature` tuple (concatenated per-molecule graphs, as in forward()).
    kin = jax.random.split(jax.random.PRNGKey(0), 8)
    n_as = [6, 5]
    n_bs = [12, 10]
    fatoms = jax.random.normal(kin[0], (sum(n_as), ATOM_FDIM), jnp.float32)
    fbonds_list, agraph_list, bgraph_list = [], [], []
    for i, (na, nb) in enumerate(zip(n_as, n_bs)):
        fb = jax.random.normal(jax.random.fold_in(kin[1], i),
                               (nb, ATOM_FDIM + BOND_FDIM), jnp.float32)
        fb = fb.at[0].set(0.0)        # row 0 acts as the padding bond (chemutils convention)
        fbonds_list.append(fb)
        agraph_list.append(jax.random.randint(jax.random.fold_in(kin[2], i),
                                              (na, 6), 0, nb, jnp.int32))
        bgraph_list.append(jax.random.randint(jax.random.fold_in(kin[3], i),
                                              (nb, 6), 0, nb, jnp.int32))
    fbonds = jnp.concatenate(fbonds_list, 0)
    agraph = jnp.concatenate(agraph_list, 0)
    bgraph = jnp.concatenate(bgraph_list, 0)
    atoms_bonds = jnp.array(list(zip(n_as, n_bs)), jnp.int32)
    feature = (fatoms, fbonds, agraph, bgraph, atoms_bonds)

    protein_seq = jax.random.randint(kin[4], (B, L), 0, protein_size, jnp.int32)

    out = cpi_mpnn_forward(feature, protein_seq, params, mpnn_hidden_size, mpnn_depth)
    out = jax.block_until_ready(out)
    assert out.shape == (B, 100) and out.dtype == jnp.float32
    print("KERNEL_OK")
</pallas_src>

<mosaic_0001>
module attributes {stable_mosaic.version = 11 : i64} {
  func.func @_mpnn_kernel(%arg0: i32, %arg1: memref<2x2xi32, #tpu.memory_space<smem>>, %arg2: memref<2x8x128xbf16, #tpu.memory_space<vmem>>, %arg3: memref<2x16x128xbf16, #tpu.memory_space<vmem>>, %arg4: memref<2x8x16xbf16, #tpu.memory_space<vmem>>, %arg5: memref<2x16x16xbf16, #tpu.memory_space<vmem>>, %arg6: memref<128x128xbf16, #tpu.memory_space<vmem>>, %arg7: memref<128x128xbf16, #tpu.memory_space<vmem>>, %arg8: memref<128x128xbf16, #tpu.memory_space<vmem>>, %arg9: memref<128x128xbf16, #tpu.memory_space<vmem>>, %arg10: memref<1x128xf32, #tpu.memory_space<vmem>>, %arg11: memref<2x128xf32, #tpu.memory_space<vmem>>) attributes {dimension_semantics = [#tpu.dimension_semantics<parallel>], iteration_bounds = array<i64: 1>, scalar_prefetch = 1 : i64, scratch_operands = 0 : i64, tpu.core_type = #tpu.core_type<tc>, window_params = [{transform_indices = @transform_0, window_bounds = array<i64: 2, 8, 128>}, {transform_indices = @transform_1, window_bounds = array<i64: 2, 16, 128>}, {transform_indices = @transform_2, window_bounds = array<i64: 2, 8, 16>}, {transform_indices = @transform_3, window_bounds = array<i64: 2, 16, 16>}, {pipeline_mode = #tpu.pipeline_mode<synchronous>, transform_indices = @transform_4, window_bounds = array<i64: 128, 128>}, {pipeline_mode = #tpu.pipeline_mode<synchronous>, transform_indices = @transform_5, window_bounds = array<i64: 128, 128>}, {pipeline_mode = #tpu.pipeline_mode<synchronous>, transform_indices = @transform_6, window_bounds = array<i64: 128, 128>}, {pipeline_mode = #tpu.pipeline_mode<synchronous>, transform_indices = @transform_7, window_bounds = array<i64: 128, 128>}, {pipeline_mode = #tpu.pipeline_mode<synchronous>, transform_indices = @transform_8, window_bounds = array<i64: 1, 128>}, {transform_indices = @transform_9, window_bounds = array<i64: 2, 128>}]} {
    %c2_i32 = arith.constant 2 : i32
    %0 = arith.muli %arg0, %c2_i32 : i32
    %c0 = arith.constant 0 : index
    %c0_0 = arith.constant 0 : index
    %c0_1 = arith.constant 0 : index
    %1 = vector.load %arg3[%c0, %c0_0, %c0_1] : memref<2x16x128xbf16, #tpu.memory_space<vmem>>, vector<1x16x128xbf16>
    %2 = vector.shape_cast %1 : vector<1x16x128xbf16> to vector<16x128xbf16>
    %c1 = arith.constant 1 : index
    %c0_2 = arith.constant 0 : index
    %c0_3 = arith.constant 0 : index
    %3 = vector.load %arg3[%c1, %c0_2, %c0_3] : memref<2x16x128xbf16, #tpu.memory_space<vmem>>, vector<1x16x128xbf16>
    %4 = vector.shape_cast %3 : vector<1x16x128xbf16> to vector<16x128xbf16>
    %5 = tpu.concatenate %2, %4 in 0 : vector<16x128xbf16>, vector<16x128xbf16> -> vector<32x128xbf16>
    %c0_4 = arith.constant 0 : index
    %c0_5 = arith.constant 0 : index
    %6 = vector.load %arg6[%c0_4, %c0_5] : memref<128x128xbf16, #tpu.memory_space<vmem>>, vector<128x128xbf16>
    %cst = arith.constant dense<0.000000e+00> : vector<32x128xf32>
    %7 = tpu.matmul %5, %6, %cst {dimension_numbers = #tpu.dot_dimension_numbers<[1], [0], [0], [1], [0, 0, 1, 1], [], []>} : vector<32x128xbf16>, vector<128x128xbf16>, vector<32x128xf32> -> vector<32x128xf32>
    %cst_6 = arith.constant 0.000000e+00 : f32
    %8 = vector.broadcast %cst_6 : f32 to vector<32x128xf32>
    %9 = arith.maximumf %7, %8 : vector<32x128xf32>
    %10 = arith.truncf %9 : vector<32x128xf32> to vector<32x128xbf16>
    %c0_7 = arith.constant 0 : index
    %c0_8 = arith.constant 0 : index
    %c0_9 = arith.constant 0 : index
    %11 = vector.load %arg5[%c0_7, %c0_8, %c0_9] : memref<2x16x16xbf16, #tpu.memory_space<vmem>>, vector<1x16x16xbf16>
    %12 = vector.shape_cast %11 : vector<1x16x16xbf16> to vector<16x16xbf16>
    %13 = vector.extract_strided_slice %10 {offsets = [0, 0], sizes = [16, 128], strides = [1, 1]} : vector<32x128xbf16> to vector<16x128xbf16>
    %cst_10 = arith.constant dense<0.000000e+00> : vector<16x128xf32>
    %14 = tpu.matmul %12, %13, %cst_10 {dimension_numbers = #tpu.dot_dimension_numbers<[1], [0], [0], [1], [0, 0, 1, 1], [], []>} : vector<16x16xbf16>, vector<16x128xbf16>, vector<16x128xf32> -> vector<16x128xf32>
    %c1_11 = arith.constant 1 : index
    %c0_12 = arith.constant 0 : index
    %c0_13 = arith.constant 0 : index
    %15 = vector.load %arg5[%c1_11, %c0_12, %c0_13] : memref<2x16x16xbf16, #tpu.memory_space<vmem>>, vector<1x16x16xbf16>
    %16 = vector.shape_cast %15 : vector<1x16x16xbf16> to vector<16x16xbf16>
    %17 = vector.extract_strided_slice %10 {offsets = [16, 0], sizes = [16, 128], strides = [1, 1]} : vector<32x128xbf16> to vector<16x128xbf16>
    %cst_14 = arith.constant dense<0.000000e+00> : vector<16x128xf32>
    %18 = tpu.matmul %16, %17, %cst_14 {dimension_numbers = #tpu.dot_dimension_numbers<[1], [0], [0], [1], [0, 0, 1, 1], [], []>} : vector<16x16xbf16>, vector<16x128xbf16>, vector<16x128xf32> -> vector<16x128xf32>
    %19 = tpu.concatenate %14, %18 in 0 : vector<16x128xf32>, vector<16x128xf32> -> vector<32x128xf32>
    %20 = arith.truncf %19 : vector<32x128xf32> to vector<32x128xbf16>
    %c0_15 = arith.constant 0 : index
    %c0_16 = arith.constant 0 : index
    %21 = vector.load %arg7[%c0_15, %c0_16] : memref<128x128xbf16, #tpu.memory_space<vmem>>, vector<128x128xbf16>
    %cst_17 = arith.constant dense<0.000000e+00> : vector<32x128xf32>
    %22 = tpu.matmul %20, %21, %cst_17 {dimension_numbers = #tpu.dot_dimension_numbers<[1], [0], [0], [1], [0, 0, 1, 1], [], []>} : vector<32x128xbf16>, vector<128x128xbf16>, vector<32x128xf32> -> vector<32x128xf32>
    %23 = arith.addf %7, %22 : vector<32x128xf32>
    %cst_18 = arith.constant 0.000000e+00 : f32
    %24 = vector.broadcast %cst_18 : f32 to vector<32x128xf32>
    %25 = arith.maximumf %23, %24 : vector<32x128xf32>
    %26 = arith.truncf %25 : vector<32x128xf32> to vector<32x128xbf16>
    %c0_19 = arith.constant 0 : index
    %c0_20 = arith.constant 0 : index
    %c0_21 = arith.constant 0 : index
    %27 = vector.load %arg5[%c0_19, %c0_20, %c0_21] : memref<2x16x16xbf16, #tpu.memory_space<vmem>>, vector<1x16x16xbf16>
    %28 = vector.shape_cast %27 : vector<1x16x16xbf16> to vector<16x16xbf16>
    %29 = vector.extract_strided_slice %26 {offsets = [0, 0], sizes = [16, 128], strides = [1, 1]} : vector<32x128xbf16> to vector<16x128xbf16>
    %cst_22 = arith.constant dense<0.000000e+00> : vector<16x128xf32>
    %30 = tpu.matmul %28, %29, %cst_22 {dimension_numbers = #tpu.dot_dimension_numbers<[1], [0], [0], [1], [0, 0, 1, 1], [], []>} : vector<16x16xbf16>, vector<16x128xbf16>, vector<16x128xf32> -> vector<16x128xf32>
    %c1_23 = arith.constant 1 : index
    %c0_24 = arith.constant 0 : index
    %c0_25 = arith.constant 0 : index
    %31 = vector.load %arg5[%c1_23, %c0_24, %c0_25] : memref<2x16x16xbf16, #tpu.memory_space<vmem>>, vector<1x16x16xbf16>
    %32 = vector.shape_cast %31 : vector<1x16x16xbf16> to vector<16x16xbf16>
    %33 = vector.extract_strided_slice %26 {offsets = [16, 0], sizes = [16, 128], strides = [1, 1]} : vector<32x128xbf16> to vector<16x128xbf16>
    %cst_26 = arith.constant dense<0.000000e+00> : vector<16x128xf32>
    %34 = tpu.matmul %32, %33, %cst_26 {dimension_numbers = #tpu.dot_dimension_numbers<[1], [0], [0], [1], [0, 0, 1, 1], [], []>} : vector<16x16xbf16>, vector<16x128xbf16>, vector<16x128xf32> -> vector<16x128xf32>
    %35 = tpu.concatenate %30, %34 in 0 : vector<16x128xf32>, vector<16x128xf32> -> vector<32x128xf32>
    %36 = arith.truncf %35 : vector<32x128xf32> to vector<32x128xbf16>
    %c0_27 = arith.constant 0 : index
    %c0_28 = arith.constant 0 : index
    %37 = vector.load %arg7[%c0_27, %c0_28] : memref<128x128xbf16, #tpu.memory_space<vmem>>, vector<128x128xbf16>
    %cst_29 = arith.constant dense<0.000000e+00> : vector<32x128xf32>
    %38 = tpu.matmul %36, %37, %cst_29 {dimension_numbers = #tpu.dot_dimension_numbers<[1], [0], [0], [1], [0, 0, 1, 1], [], []>} : vector<32x128xbf16>, vector<128x128xbf16>, vector<32x128xf32> -> vector<32x128xf32>
    %39 = arith.addf %7, %38 : vector<32x128xf32>
    %cst_30 = arith.constant 0.000000e+00 : f32
    %40 = vector.broadcast %cst_30 : f32 to vector<32x128xf32>
    %41 = arith.maximumf %39, %40 : vector<32x128xf32>
    %42 = arith.truncf %41 : vector<32x128xf32> to vector<32x128xbf16>
    %c0_31 = arith.constant 0 : index
    %c0_32 = arith.constant 0 : index
    %c0_33 = arith.constant 0 : index
    %43 = vector.load %arg4[%c0_31, %c0_32, %c0_33] : memref<2x8x16xbf16, #tpu.memory_space<vmem>>, vector<1x8x16xbf16>
    %44 = vector.shape_cast %43 : vector<1x8x16xbf16> to vector<8x16xbf16>
    %45 = vector.extract_strided_slice %42 {offsets = [0, 0], sizes = [16, 128], strides = [1, 1]} : vector<32x128xbf16> to vector<16x128xbf16>
    %cst_34 = arith.constant dense<0.000000e+00> : vector<8x128xf32>
    %46 = tpu.matmul %44, %45, %cst_34 {dimension_numbers = #tpu.dot_dimension_numbers<[1], [0], [0], [1], [0, 0, 1, 1], [], []>} : vector<8x16xbf16>, vector<16x128xbf16>, vector<8x128xf32> -> vector<8x128xf32>
    %c1_35 = arith.constant 1 : index
    %c0_36 = arith.constant 0 : index
    %c0_37 = arith.constant 0 : index
    %47 = vector.load %arg4[%c1_35, %c0_36, %c0_37] : memref<2x8x16xbf16, #tpu.memory_space<vmem>>, vector<1x8x16xbf16>
    %48 = vector.shape_cast %47 : vector<1x8x16xbf16> to vector<8x16xbf16>
    %49 = vector.extract_strided_slice %42 {offsets = [16, 0], sizes = [16, 128], strides = [1, 1]} : vector<32x128xbf16> to vector<16x128xbf16>
    %cst_38 = arith.constant dense<0.000000e+00> : vector<8x128xf32>
    %50 = tpu.matmul %48, %49, %cst_38 {dimension_numbers = #tpu.dot_dimension_numbers<[1], [0], [0], [1], [0, 0, 1, 1], [], []>} : vector<8x16xbf16>, vector<16x128xbf16>, vector<8x128xf32> -> vector<8x128xf32>
    %51 = tpu.concatenate %46, %50 in 0 : vector<8x128xf32>, vector<8x128xf32> -> vector<16x128xf32>
    %c0_39 = arith.constant 0 : index
    %c0_40 = arith.constant 0 : index
    %c0_41 = arith.constant 0 : index
    %52 = vector.load %arg2[%c0_39, %c0_40, %c0_41] : memref<2x8x128xbf16, #tpu.memory_space<vmem>>, vector<1x8x128xbf16>
    %53 = vector.shape_cast %52 : vector<1x8x128xbf16> to vector<8x128xbf16>
    %c1_42 = arith.constant 1 : index
    %c0_43 = arith.constant 0 : index
    %c0_44 = arith.constant 0 : index
    %54 = vector.load %arg2[%c1_42, %c0_43, %c0_44] : memref<2x8x128xbf16, #tpu.memory_space<vmem>>, vector<1x8x128xbf16>
    %55 = vector.shape_cast %54 : vector<1x8x128xbf16> to vector<8x128xbf16>
    %56 = tpu.concatenate %53, %55 in 0 : vector<8x128xbf16>, vector<8x128xbf16> -> vector<16x128xbf16>
    %c0_45 = arith.constant 0 : index
    %c0_46 = arith.constant 0 : index
    %57 = vector.load %arg8[%c0_45, %c0_46] : memref<128x128xbf16, #tpu.memory_space<vmem>>, vector<128x128xbf16>
    %cst_47 = arith.constant dense<0.000000e+00> : vector<16x128xf32>
    %58 = tpu.matmul %56, %57, %cst_47 {dimension_numbers = #tpu.dot_dimension_numbers<[1], [0], [0], [1], [0, 0, 1, 1], [], []>} : vector<16x128xbf16>, vector<128x128xbf16>, vector<16x128xf32> -> vector<16x128xf32>
    %59 = arith.truncf %51 : vector<16x128xf32> to vector<16x128xbf16>
    %c0_48 = arith.constant 0 : index
    %c0_49 = arith.constant 0 : index
    %60 = vector.load %arg9[%c0_48, %c0_49] : memref<128x128xbf16, #tpu.memory_space<vmem>>, vector<128x128xbf16>
    %cst_50 = arith.constant dense<0.000000e+00> : vector<16x128xf32>
    %61 = tpu.matmul %59, %60, %cst_50 {dimension_numbers = #tpu.dot_dimension_numbers<[1], [0], [0], [1], [0, 0, 1, 1], [], []>} : vector<16x128xbf16>, vector<128x128xbf16>, vector<16x128xf32> -> vector<16x128xf32>
    %62 = arith.addf %58, %61 : vector<16x128xf32>
    %c0_51 = arith.constant 0 : index
    %c0_52 = arith.constant 0 : index
    %63 = vector.load %arg10[%c0_51, %c0_52] : memref<1x128xf32, #tpu.memory_space<vmem>>, vector<1x128xf32>
    %64 = vector.broadcast %63 : vector<1x128xf32> to vector<16x128xf32>
    %65 = arith.addf %62, %64 : vector<16x128xf32>
    %cst_53 = arith.constant 0.000000e+00 : f32
    %66 = vector.broadcast %cst_53 : f32 to vector<16x128xf32>
    %67 = arith.maximumf %65, %66 : vector<16x128xf32>
    %68 = tpu.iota {dimensions = array<i32: 0>} : vector<8x1xi32>
    %c0_i32 = arith.constant 0 : i32
    %69 = arith.addi %0, %c0_i32 : i32
    %70 = arith.index_cast %69 : i32 to index
    %c0_54 = arith.constant 0 : index
    %71 = memref.load %arg1[%70, %c0_54] : memref<2x2xi32, #tpu.memory_space<smem>>
    %72 = vector.broadcast %71 : i32 to vector<8x1xi32>
    %73 = arith.cmpi slt, %68, %72 : vector<8x1xi32>
    %74 = arith.extui %73 : vector<8x1xi1> to vector<8x1xi32>
    %75 = arith.sitofp %74 : vector<8x1xi32> to vector<8x1xf32>
    %c1_i32 = arith.constant 1 : i32
    %76 = arith.maxsi %71, %c1_i32 : i32
    %77 = arith.sitofp %76 : i32 to f32
    %78 = vector.extract_strided_slice %67 {offsets = [0, 0], sizes = [8, 128], strides = [1, 1]} : vector<16x128xf32> to vector<8x128xf32>
    %79 = vector.broadcast %75 : vector<8x1xf32> to vector<8x128xf32>
    %80 = arith.mulf %78, %79 : vector<8x128xf32>
    %cst_55 = arith.constant dense<0.000000e+00> : vector<128xf32>
    %81 = vector.multi_reduction <add>, %80, %cst_55 [0] : vector<8x128xf32> to vector<128xf32>
    %82 = vector.shape_cast %81 : vector<128xf32> to vector<1x128xf32>
    %cst_56 = arith.constant 1.000000e+00 : f32
    %83 = arith.divf %cst_56, %77 : f32
    %84 = vector.broadcast %83 : f32 to vector<1x128xf32>
    %85 = arith.mulf %82, %84 : vector<1x128xf32>
    %c1_i32_57 = arith.constant 1 : i32
    %86 = arith.addi %0, %c1_i32_57 : i32
    %87 = arith.index_cast %86 : i32 to index
    %c0_58 = arith.constant 0 : index
    %88 = memref.load %arg1[%87, %c0_58] : memref<2x2xi32, #tpu.memory_space<smem>>
    %89 = vector.broadcast %88 : i32 to vector<8x1xi32>
    %90 = arith.cmpi slt, %68, %89 : vector<8x1xi32>
    %91 = arith.extui %90 : vector<8x1xi1> to vector<8x1xi32>
    %92 = arith.sitofp %91 : vector<8x1xi32> to vector<8x1xf32>
    %c1_i32_59 = arith.constant 1 : i32
    %93 = arith.maxsi %88, %c1_i32_59 : i32
    %94 = arith.sitofp %93 : i32 to f32
    %95 = vector.extract_strided_slice %67 {offsets = [8, 0], sizes = [8, 128], strides = [1, 1]} : vector<16x128xf32> to vector<8x128xf32>
    %96 = vector.broadcast %92 : vector<8x1xf32> to vector<8x128xf32>
    %97 = arith.mulf %95, %96 : vector<8x128xf32>
    %cst_60 = arith.constant dense<0.000000e+00> : vector<128xf32>
    %98 = vector.multi_reduction <add>, %97, %cst_60 [0] : vector<8x128xf32> to vector<128xf32>
    %99 = vector.shape_cast %98 : vector<128xf32> to vector<1x128xf32>
    %cst_61 = arith.constant 1.000000e+00 : f32
    %100 = arith.divf %cst_61, %94 : f32
    %101 = vector.broadcast %100 : f32 to vector<1x128xf32>
    %102 = arith.mulf %99, %101 : vector<1x128xf32>
    %103 = tpu.concatenate %85, %102 in 0 : vector<1x128xf32>, vector<1x128xf32> -> vector<2x128xf32>
    %c0_62 = arith.constant 0 : index
    %c0_63 = arith.constant 0 : index
    %104 = vector.load %arg11[%c0_62, %c0_63] : memref<2x128xf32, #tpu.memory_space<vmem>>, vector<2x128xf32>
    tpu.vector_store %arg11[%c0_62, %c0_63], %103 {strides = array<i32>} : memref<2x128xf32, #tpu.memory_space<vmem>>, vector<2x128xf32>,
    return
  }
  func.func @transform_0(%arg0: i32, %arg1: memref<2x2xi32, #tpu.memory_space<smem>>) -> (i32, i32, i32) {
    %c0_i32 = arith.constant 0 : i32
    %c0_i32_0 = arith.constant 0 : i32
    %c0_i32_1 = arith.constant 0 : i32
    return %arg0, %c0_i32, %c0_i32_0 : i32, i32, i32
  }
  func.func @transform_1(%arg0: i32, %arg1: memref<2x2xi32, #tpu.memory_space<smem>>) -> (i32, i32, i32) {
    %c0_i32 = arith.constant 0 : i32
    %c0_i32_0 = arith.constant 0 : i32
    %c0_i32_1 = arith.constant 0 : i32
    return %arg0, %c0_i32, %c0_i32_0 : i32, i32, i32
  }
  func.func @transform_2(%arg0: i32, %arg1: memref<2x2xi32, #tpu.memory_space<smem>>) -> (i32, i32, i32) {
    %c0_i32 = arith.constant 0 : i32
    %c0_i32_0 = arith.constant 0 : i32
    %c0_i32_1 = arith.constant 0 : i32
    return %arg0, %c0_i32, %c0_i32_0 : i32, i32, i32
  }
  func.func @transform_3(%arg0: i32, %arg1: memref<2x2xi32, #tpu.memory_space<smem>>) -> (i32, i32, i32) {
    %c0_i32 = arith.constant 0 : i32
    %c0_i32_0 = arith.constant 0 : i32
    %c0_i32_1 = arith.constant 0 : i32
    return %arg0, %c0_i32, %c0_i32_0 : i32, i32, i32
  }
  func.func @transform_4(%arg0: i32, %arg1: memref<2x2xi32, #tpu.memory_space<smem>>) -> (i32, i32) {
    %c0_i32 = arith.constant 0 : i32
    %c0_i32_0 = arith.constant 0 : i32
    %c0_i32_1 = arith.constant 0 : i32
    return %c0_i32, %c0_i32_0 : i32, i32
  }
  func.func @transform_5(%arg0: i32, %arg1: memref<2x2xi32, #tpu.memory_space<smem>>) -> (i32, i32) {
    %c0_i32 = arith.constant 0 : i32
    %c0_i32_0 = arith.constant 0 : i32
    %c0_i32_1 = arith.constant 0 : i32
    return %c0_i32, %c0_i32_0 : i32, i32
  }
  func.func @transform_6(%arg0: i32, %arg1: memref<2x2xi32, #tpu.memory_space<smem>>) -> (i32, i32) {
    %c0_i32 = arith.constant 0 : i32
    %c0_i32_0 = arith.constant 0 : i32
    %c0_i32_1 = arith.constant 0 : i32
    return %c0_i32, %c0_i32_0 : i32, i32
  }
  func.func @transform_7(%arg0: i32, %arg1: memref<2x2xi32, #tpu.memory_space<smem>>) -> (i32, i32) {
    %c0_i32 = arith.constant 0 : i32
    %c0_i32_0 = arith.constant 0 : i32
    %c0_i32_1 = arith.constant 0 : i32
    return %c0_i32, %c0_i32_0 : i32, i32
  }
  func.func @transform_8(%arg0: i32, %arg1: memref<2x2xi32, #tpu.memory_space<smem>>) -> (i32, i32) {
    %c0_i32 = arith.constant 0 : i32
    %c0_i32_0 = arith.constant 0 : i32
    %c0_i32_1 = arith.constant 0 : i32
    return %c0_i32, %c0_i32_0 : i32, i32
  }
  func.func @transform_9(%arg0: i32, %arg1: memref<2x2xi32, #tpu.memory_space<smem>>) -> (i32, i32) {
    %c0_i32 = arith.constant 0 : i32
    %c0_i32_0 = arith.constant 0 : i32
    return %arg0, %c0_i32 : i32, i32
  }
}

</mosaic_0001>

<llo_original>
// kernel: tpu_custom_call.1
$region0: #{tpu_custom_call.1}
  #allocation0 [shape = 'u32[]', space=smem, size = 0x4, offset = 0x4, fixed_abs, tag = 'smem constant byte address 0x4 - core index']
  #allocation1 [shape = 'u32[72,128]{1,0:T(1,128)}', space=vmem, size = 0x9000, scoped, tag = 'internal scratch']
  #allocation2 [shape = 's32[1]{0}', space=sflag, size = 0x4, scoped, tag = 'scoped memory for tpu_custom_call.1']
  #allocation3 [shape = 'u8[1024]{0}', space=smem, size = 0x400, scoped, tag = 'prefetched SMEM operand 0']
  %s0 = inlined_call_operand.hbm [shape: s32[2,2], index: 0, kind: input, shape index: {}]
  %s1 = inlined_call_operand.hbm [shape: bf16[2,8,128], index: 1, kind: input, shape index: {}]
  %s2 = inlined_call_operand.hbm [shape: bf16[2,16,128], index: 2, kind: input, shape index: {}]
  %s3 = inlined_call_operand.hbm [shape: bf16[2,8,16], index: 3, kind: input, shape index: {}]
  %s4 = inlined_call_operand.hbm [shape: bf16[2,16,16], index: 4, kind: input, shape index: {}]
  %s5 = inlined_call_operand.hbm [shape: bf16[128,128], index: 5, kind: input, shape index: {}]
  %s6 = inlined_call_operand.hbm [shape: bf16[128,128], index: 6, kind: input, shape index: {}]
  %s7 = inlined_call_operand.hbm [shape: bf16[128,128], index: 7, kind: input, shape index: {}]
  %s8 = inlined_call_operand.hbm [shape: bf16[128,128], index: 8, kind: input, shape index: {}]
  %s9 = inlined_call_operand.vmem [shape: f32[1,128], index: 9, kind: input, shape index: {}]
  %s10 = inlined_call_operand.hbm [shape: f32[2,128], index: 10, kind: output, shape index: {}]
  %s11 = sld [smem:[#allocation0]]
  $region78: #{tpu_custom_call.1} parent=0
    _
  %s13 = ssub.s32 1, %s11
  %s14 = scalar_select 0, %s13, %s11
  %s16 = sshll.u32 %s0, 4
  %s17 = int_to_ptr.hbm [resolvable:$true] %s16
  %19 = dma.hbm_to_smem %s17, 32, [#allocation3], [#allocation2]
  %21 = dma.done [#allocation2], 32
  %22 = sfence
  $region1: #{tpu_custom_call.1} parent=0
    #allocation4 [shape = 'u8[4096]{0}', space=vmem, size = 0x1000, scoped, tag = 'input window, operand 1, single buffered']
    #allocation5 [shape = 's32[1]{0}', space=sflag, size = 0x4, scoped, tag = 'scoped memory for tpu_custom_call.1']
    #allocation6 [shape = 's32[1]{0}', space=sflag, size = 0x4, scoped, tag = 'scoped memory for tpu_custom_call.1']
    #allocation7 [shape = 'u8[8192]{0}', space=vmem, size = 0x2000, scoped, tag = 'input window, operand 2, single buffered']
    #allocation8 [shape = 's32[1]{0}', space=sflag, size = 0x4, scoped, tag = 'scoped memory for tpu_custom_call.1']
    #allocation9 [shape = 'u8[4096]{0}', space=vmem, size = 0x1000, scoped, tag = 'input window, operand 3, single buffered']
    #allocation10 [shape = 'u8[8192]{0}', space=vmem, size = 0x2000, scoped, tag = 'input window, operand 4, single buffered']
    #allocation11 [shape = 's32[1]{0}', space=sflag, size = 0x4, scoped, tag = 'scoped memory for tpu_custom_call.1']
    #allocation12 [shape = 'u8[32768]{0}', space=vmem, size = 0x8000, scoped, tag = 'input window, operand 5, single buffered']
    #allocation13 [shape = 'u8[32768]{0}', space=vmem, size = 0x8000, scoped, tag = 'input window, operand 6, single buffered']
    #allocation14 [shape = 's32[1]{0}', space=sflag, size = 0x4, scoped, tag = 'scoped memory for tpu_custom_call.1']
    #allocation15 [shape = 'u8[32768]{0}', space=vmem, size = 0x8000, scoped, tag = 'input window, operand 7, single buffered']
    #allocation16 [shape = 'u8[32768]{0}', space=vmem, size = 0x8000, scoped, tag = 'input window, operand 8, single buffered']
    #allocation17 [shape = 's32[1]{0}', space=sflag, size = 0x4, scoped, tag = 'scoped memory for tpu_custom_call.1']
    #allocation18 [shape = 'u8[1024]{0}', space=vmem, size = 0x400, scoped, tag = 'output window, operand 0, single buffered']
    %23 = vsyncpa [#allocation5], 0
    %24 = vsyncpa [#allocation8], 0
    %25 = vsyncpa [#allocation11], 0
    %26 = vsyncpa [#allocation14], 0
    %27 = vsyncpa [#allocation17], 0
    %28 = vsyncpa [#allocation6], 0
    // Predicated region
    $region2: #{tpu_custom_call.1} parent=1 // pred_check
      _
    $region3: #{tpu_custom_call.1} parent=1 // pred_check_branch
      %30 = sbr.rel (0) target = $region5
    $region4: #{tpu_custom_call.1} parent=1 // pred_region
      %32 = vsyncadd [#allocation5], 0
      %s33 = sshll.u32 %s1, 4
      %s34 = int_to_ptr.hbm [resolvable:$true] %s33
      %s35 = sshll.u32 [#allocation4], 4
      %s36 = int_to_ptr.vmem [resolvable:$true] %s35
      %41 = dma.hbm_to_vmem [thread:$0]  %s34, 128, %s36, [#allocation5], 64, 64, 4
    $region5: #{tpu_custom_call.1} parent=1 // pred_fallthru
      _
    // Predicated region
    $region6: #{tpu_custom_call.1} parent=1 // pred_check
      _
    $region7: #{tpu_custom_call.1} parent=1 // pred_check_branch
      %43 = sbr.rel (0) target = $region9
    $region8: #{tpu_custom_call.1} parent=1 // pred_region
      %45 = vsyncadd [#allocation8], 0
      %s46 = sshll.u32 %s2, 4
      %s47 = int_to_ptr.hbm [resolvable:$true] %s46
      %s48 = sshll.u32 [#allocation7], 4
      %s49 = int_to_ptr.vmem [resolvable:$true] %s48
      %54 = dma.hbm_to_vmem [thread:$0]  %s47, 256, %s49, [#allocation8], 64, 64, 4
    $region9: #{tpu_custom_call.1} parent=1 // pred_fallthru
      _
    // Predicated region
    $region10: #{tpu_custom_call.1} parent=1 // pred_check
      _
    $region11: #{tpu_custom_call.1} parent=1 // pred_check_branch
      %56 = sbr.rel (0) target = $region13
    $region12: #{tpu_custom_call.1} parent=1 // pred_region
      %58 = vsyncadd [#allocation8], 0
      %s59 = sshll.u32 %s3, 4
      %s60 = int_to_ptr.hbm [resolvable:$true] %s59
      %s61 = sshll.u32 [#allocation9], 4
      %s62 = int_to_ptr.vmem [resolvable:$true] %s61
      %67 = dma.hbm_to_vmem [thread:$0]  %s60, 128, %s62, [#allocation8], 64, 64, 4
    $region13: #{tpu_custom_call.1} parent=1 // pred_fallthru
      _
    // Predicated region
    $region14: #{tpu_custom_call.1} parent=1 // pred_check
      _
    $region15: #{tpu_custom_call.1} parent=1 // pred_check_branch
      %69 = sbr.rel (0) target = $region17
    $region16: #{tpu_custom_call.1} parent=1 // pred_region
      %71 = vsyncadd [#allocation11], 0
      %s72 = sshll.u32 %s4, 4
      %s73 = int_to_ptr.hbm [resolvable:$true] %s72
      %s74 = sshll.u32 [#allocation10], 4
      %s75 = int_to_ptr.vmem [resolvable:$true] %s74
      %80 = dma.hbm_to_vmem [thread:$0]  %s73, 256, %s75, [#allocation11], 64, 64, 4
    $region17: #{tpu_custom_call.1} parent=1 // pred_fallthru
      _
    // Predicated region
    $region18: #{tpu_custom_call.1} parent=1 // pred_check
      _
    $region19: #{tpu_custom_call.1} parent=1 // pred_check_branch
      %82 = sbr.rel (0) target = $region21
    $region20: #{tpu_custom_call.1} parent=1 // pred_region
      %84 = vsyncadd [#allocation11], 0
      %s85 = sshll.u32 %s5, 4
      %s86 = int_to_ptr.hbm [resolvable:$true] %s85
      %s87 = sshll.u32 [#allocation12], 4
      %s88 = int_to_ptr.vmem [resolvable:$true] %s87
      %93 = dma.hbm_to_vmem [thread:$0]  %s86, 1024, %s88, [#allocation11], 64, 64, 4
    $region21: #{tpu_custom_call.1} parent=1 // pred_fallthru
      _
    // Predicated region
    $region22: #{tpu_custom_call.1} parent=1 // pred_check
      _
    $region23: #{tpu_custom_call.1} parent=1 // pred_check_branch
      %95 = sbr.rel (0) target = $region25
    $region24: #{tpu_custom_call.1} parent=1 // pred_region
      %97 = vsyncadd [#allocation14], 0
      %s98 = sshll.u32 %s6, 4
      %s99 = int_to_ptr.hbm [resolvable:$true] %s98
      %s100 = sshll.u32 [#allocation13], 4
      %s101 = int_to_ptr.vmem [resolvable:$true] %s100
      %106 = dma.hbm_to_vmem [thread:$0]  %s99, 1024, %s101, [#allocation14], 64, 64, 4
    $region25: #{tpu_custom_call.1} parent=1 // pred_fallthru
      _
    // Predicated region
    $region26: #{tpu_custom_call.1} parent=1 // pred_check
      _
    $region27: #{tpu_custom_call.1} parent=1 // pred_check_branch
      %108 = sbr.rel (0) target = $region29
    $region28: #{tpu_custom_call.1} parent=1 // pred_region
      %110 = vsyncadd [#allocation14], 0
      %s111 = sshll.u32 %s7, 4
      %s112 = int_to_ptr.hbm [resolvable:$true] %s111
      %s113 = sshll.u32 [#allocation15], 4
      %s114 = int_to_ptr.vmem [resolvable:$true] %s113
      %119 = dma.hbm_to_vmem [thread:$0]  %s112, 1024, %s114, [#allocation14], 64, 64, 4
    $region29: #{tpu_custom_call.1} parent=1 // pred_fallthru
      _
    // Predicated region
    $region30: #{tpu_custom_call.1} parent=1 // pred_check
      _
    $region31: #{tpu_custom_call.1} parent=1 // pred_check_branch
      %121 = sbr.rel (0) target = $region33
    $region32: #{tpu_custom_call.1} parent=1 // pred_region
      %123 = vsyncadd [#allocation17], 0
      %s124 = sshll.u32 %s8, 4
      %s125 = int_to_ptr.hbm [resolvable:$true] %s124
      %s126 = sshll.u32 [#allocation16], 4
      %s127 = int_to_ptr.vmem [resolvable:$true] %s126
      %132 = dma.hbm_to_vmem [thread:$0]  %s125, 1024, %s127, [#allocation17], 64, 64, 4
    $region33: #{tpu_custom_call.1} parent=1 // pred_fallthru
      _
    // Predicated region
    $region34: #{tpu_custom_call.1} parent=1 // pred_check
      _
    $region35: #{tpu_custom_call.1} parent=1 // pred_check_branch
      %134 = sbr.rel (0) target = $region37
    $region36: #{tpu_custom_call.1} parent=1 // pred_region
      _
    $region37: #{tpu_custom_call.1} parent=1 // pred_fallthru
      _
    // Predicated region
    $region38: #{tpu_custom_call.1} parent=1 // pred_check
      _
    $region39: #{tpu_custom_call.1} parent=1 // pred_check_branch
      %136 = sbr.rel (0) target = $region41
    $region40: #{tpu_custom_call.1} parent=1 // pred_region
      %138 = dma.done [#allocation5], 128
    $region41: #{tpu_custom_call.1} parent=1 // pred_fallthru
      _
    // Predicated region
    $region42: #{tpu_custom_call.1} parent=1 // pred_check
      _
    $region43: #{tpu_custom_call.1} parent=1 // pred_check_branch
      %140 = sbr.rel (0) target = $region45
    $region44: #{tpu_custom_call.1} parent=1 // pred_region
      %142 = dma.done [#allocation8], 256
    $region45: #{tpu_custom_call.1} parent=1 // pred_fallthru
      _
    // Predicated region
    $region46: #{tpu_custom_call.1} parent=1 // pred_check
      _
    $region47: #{tpu_custom_call.1} parent=1 // pred_check_branch
      %144 = sbr.rel (0) target = $region49
    $region48: #{tpu_custom_call.1} parent=1 // pred_region
      %146 = dma.done [#allocation8], 128
    $region49: #{tpu_custom_call.1} parent=1 // pred_fallthru
      _
    // Predicated region
    $region50: #{tpu_custom_call.1} parent=1 // pred_check
      _
    $region51: #{tpu_custom_call.1} parent=1 // pred_check_branch
      %148 = sbr.rel (0) target = $region53
    $region52: #{tpu_custom_call.1} parent=1 // pred_region
      %150 = dma.done [#allocation11], 256
    $region53: #{tpu_custom_call.1} parent=1 // pred_fallthru
      _
    // Predicated region
    $region54: #{tpu_custom_call.1} parent=1 // pred_check
      _
    $region55: #{tpu_custom_call.1} parent=1 // pred_check_branch
      %152 = sbr.rel (0) target = $region57
    $region56: #{tpu_custom_call.1} parent=1 // pred_region
      %154 = dma.done [#allocation11], 1024
    $region57: #{tpu_custom_call.1} parent=1 // pred_fallthru
      _
    // Predicated region
    $region58: #{tpu_custom_call.1} parent=1 // pred_check
      _
    $region59: #{tpu_custom_call.1} parent=1 // pred_check_branch
      %156 = sbr.rel (0) target = $region61
    $region60: #{tpu_custom_call.1} parent=1 // pred_region
      %158 = dma.done [#allocation14], 1024
    $region61: #{tpu_custom_call.1} parent=1 // pred_fallthru
      _
    // Predicated region
    $region62: #{tpu_custom_call.1} parent=1 // pred_check
      _
    $region63: #{tpu_custom_call.1} parent=1 // pred_check_branch
      %160 = sbr.rel (0) target = $region65
    $region64: #{tpu_custom_call.1} parent=1 // pred_region
      %162 = dma.done [#allocation14], 1024
    $region65: #{tpu_custom_call.1} parent=1 // pred_fallthru
      _
    // Predicated region
    $region66: #{tpu_custom_call.1} parent=1 // pred_check
      _
    $region67: #{tpu_custom_call.1} parent=1 // pred_check_branch
      %164 = sbr.rel (0) target = $region69
    $region68: #{tpu_custom_call.1} parent=1 // pred_region
      %166 = dma.done [#allocation17], 1024
    $region69: #{tpu_custom_call.1} parent=1 // pred_fallthru
      _
    %s168 = smul.u32 0, 2
    %v169 = vld [vmem:[#allocation7] sm:$0xf]
    %v170 = vld [vmem:[#allocation7 + $0x4] sm:$0xf]
    %s171 = scalar_lea.vmem [#allocation7], 8
    %v172 = vld [vmem:[%s171] sm:$0xf]
    %v173 = vld [vmem:[%s171 + $0x4] sm:$0xf]
    %v176 = vunpack.c.l.b16 %v169
    %v177 = vunpack.c.l.b16 %v170
    %v178 = vpack.c.b16 %v177, %v176
    %v182 = vunpack.c.l.b16 %v172
    %v183 = vunpack.c.l.b16 %v173
    %v184 = vpack.c.b16 %v183, %v182
    %v186 = vld [vmem:[#allocation12] sm:$0xf]
    %v187 = vld [vmem:[#allocation12 + $0x4] sm:$0xf]
    %v188 = vld [vmem:[#allocation12 + $0x8] sm:$0xf]
    %v189 = vld [vmem:[#allocation12 + $0xc] sm:$0xf]
    %v190 = vld [vmem:[#allocation12 + $0x10] sm:$0xf]
    %v191 = vld [vmem:[#allocation12 + $0x14] sm:$0xf]
    %v192 = vld [vmem:[#allocation12 + $0x18] sm:$0xf]
    %v193 = vld [vmem:[#allocation12 + $0x1c] sm:$0xf]
    %v194 = vld [vmem:[#allocation12 + $0x20] sm:$0xf]
    %v195 = vld [vmem:[#allocation12 + $0x24] sm:$0xf]
    %v196 = vld [vmem:[#allocation12 + $0x28] sm:$0xf]
    %v197 = vld [vmem:[#allocation12 + $0x2c] sm:$0xf]
    %v198 = vld [vmem:[#allocation12 + $0x30] sm:$0xf]
    %v199 = vld [vmem:[#allocation12 + $0x34] sm:$0xf]
    %v200 = vld [vmem:[#allocation12 + $0x38] sm:$0xf]
    %v201 = vld [vmem:[#allocation12 + $0x3c] sm:$0xf]
    %v218 = vunpack.c.l.b16 %v186
    %v219 = vunpack.c.l.b16 %v187
    %v220 = vunpack.c.l.b16 %v188
    %v221 = vunpack.c.l.b16 %v189
    %v222 = vunpack.c.l.b16 %v190
    %v223 = vunpack.c.l.b16 %v191
    %v224 = vunpack.c.l.b16 %v192
    %v225 = vunpack.c.l.b16 %v193
    %v226 = vunpack.c.l.b16 %v194
    %v227 = vunpack.c.l.b16 %v195
    %v228 = vunpack.c.l.b16 %v196
    %v229 = vunpack.c.l.b16 %v197
    %v230 = vunpack.c.l.b16 %v198
    %v231 = vunpack.c.l.b16 %v199
    %v232 = vunpack.c.l.b16 %v200
    %v233 = vunpack.c.l.b16 %v201
    %v234 = vpack.c.b16 %v219, %v218
    %v235 = vpack.c.b16 %v221, %v220
    %v236 = vpack.c.b16 %v223, %v222
    %v237 = vpack.c.b16 %v225, %v224
    %v238 = vpack.c.b16 %v227, %v226
    %v239 = vpack.c.b16 %v229, %v228
    %v240 = vpack.c.b16 %v231, %v230
    %v241 = vpack.c.b16 %v233, %v232
    %250 = vmatpush.bf16.msra.mxu0 %v241
    %251 = vmatpush.bf16.msra.mxu0 %v240
    %252 = vmatpush.bf16.msra.mxu0 %v239
    %253 = vmatpush.bf16.msra.mxu0 %v238
    %254 = vmatpush.bf16.msra.mxu0 %v237
    %255 = vmatpush.bf16.msra.mxu0 %v236
    %256 = vmatpush.bf16.msra.mxu0 %v235
    %257 = vmatpush.bf16.msra.mxu0 %v234
    %258 = vmatmul.bf16.gmra.mxu0 %v178
    %v259 = vpop.f32.mrf.mxu0
    %v260 = vadd.f32 0.0, %v259
    %v261 = vpop.f32.mrf.mxu0
    %v262 = vadd.f32 0.0, %v261
    %263 = vmatmul.bf16.gmra.mxu0 %v184
    %v264 = vpop.f32.mrf.mxu0
    %v265 = vadd.f32 0.0, %v264
    %v266 = vpop.f32.mrf.mxu0
    %v267 = vadd.f32 0.0, %v266
    %268 = vdwg.mxu0
    %v269 = vmax.f32 %v260, 0.0
    %v270 = vmax.f32 %v262, 0.0
    %v271 = vmax.f32 %v265, 0.0
    %v272 = vmax.f32 %v267, 0.0
    %v273 = vpack.c.bf16 %v269, %v269
    %v274 = vpack.c.bf16 %v270, %v270
    %v275 = vpack.c.bf16 %v271, %v271
    %v276 = vpack.c.bf16 %v272, %v272
    %v277 = vld [vmem:[#allocation10] sm:$0xf]
    %v278 = vld [vmem:[#allocation10 + $0x4] sm:$0xf]
    %v281 = vunpack.c.l.b16 %v277
    %v282 = vunpack.c.l.b16 %v278
    %v283 = vpack.c.b16 %v282, %v281
    %v286 = vunpack.c.l.b16 %v273
    %v287 = vunpack.c.l.b16 %v274
    %v288 = vpack.c.b16 %v287, %v286
    %vm290 = vcmask 130048
    %v292 = vsel %vm290, %v283, 0
    %294 = vmatpush.bf16.msra.mxu0 0
    %295 = vmatpush.bf16.msra.mxu0 0
    %296 = vmatpush.bf16.msra.mxu0 0
    %297 = vmatpush.bf16.msra.mxu0 0
    %298 = vmatpush.bf16.msra.mxu0 0
    %299 = vmatpush.bf16.msra.mxu0 0
    %300 = vmatpush.bf16.msra.mxu0 0
    %301 = vmatpush.bf16.msra.mxu0 %v288
    %302 = vmatmul.bf16.gmra.mxu0 %v292
    %v303 = vpop.f32.mrf.mxu0
    %v304 = vadd.f32 0.0, %v303
    %v305 = vpop.f32.mrf.mxu0
    %v306 = vadd.f32 0.0, %v305
    %307 = vdwg.mxu0
    %s308 = scalar_lea.vmem [#allocation10], 8
    %v309 = vld [vmem:[%s308] sm:$0xf]
    %v310 = vld [vmem:[%s308 + $0x4] sm:$0xf]
    %v313 = vunpack.c.l.b16 %v309
    %v314 = vunpack.c.l.b16 %v310
    %v315 = vpack.c.b16 %v314, %v313
    %v318 = vunpack.c.l.b16 %v275
    %v319 = vunpack.c.l.b16 %v276
    %v320 = vpack.c.b16 %v319, %v318
    %v323 = vsel %vm290, %v315, 0
    %325 = vmatpush.bf16.msra.mxu0 0
    %326 = vmatpush.bf16.msra.mxu0 0
    %327 = vmatpush.bf16.msra.mxu0 0
    %328 = vmatpush.bf16.msra.mxu0 0
    %329 = vmatpush.bf16.msra.mxu0 0
    %330 = vmatpush.bf16.msra.mxu0 0
    %331 = vmatpush.bf16.msra.mxu0 0
    %332 = vmatpush.bf16.msra.mxu0 %v320
    %333 = vmatmul.bf16.gmra.mxu0 %v323
    %v334 = vpop.f32.mrf.mxu0
    %v335 = vadd.f32 0.0, %v334
    %v336 = vpop.f32.mrf.mxu0
    %v337 = vadd.f32 0.0, %v336
    %338 = vdwg.mxu0
    %v339 = vpack.c.bf16 %v306, %v304
    %v340 = vpack.c.bf16 %v337, %v335
    %v341 = vld [vmem:[#allocation13] sm:$0xf]
    %v342 = vld [vmem:[#allocation13 + $0x4] sm:$0xf]
    %v343 = vld [vmem:[#allocation13 + $0x8] sm:$0xf]
    %v344 = vld [vmem:[#allocation13 + $0xc] sm:$0xf]
    %v345 = vld [vmem:[#allocation13 + $0x10] sm:$0xf]
    %v346 = vld [vmem:[#allocation13 + $0x14] sm:$0xf]
    %v347 = vld [vmem:[#allocation13 + $0x18] sm:$0xf]
    %v348 = vld [vmem:[#allocation13 + $0x1c] sm:$0xf]
    %v349 = vld [vmem:[#allocation13 + $0x20] sm:$0xf]
    %v350 = vld [vmem:[#allocation13 + $0x24] sm:$0xf]
    %v351 = vld [vmem:[#allocation13 + $0x28] sm:$0xf]
    %v352 = vld [vmem:[#allocation13 + $0x2c] sm:$0xf]
    %v353 = vld [vmem:[#allocation13 + $0x30] sm:$0xf]
    %v354 = vld [vmem:[#allocation13 + $0x34] sm:$0xf]
    %v355 = vld [vmem:[#allocation13 + $0x38] sm:$0xf]
    %v356 = vld [vmem:[#allocation13 + $0x3c] sm:$0xf]
    %v373 = vunpack.c.l.b16 %v341
    %v374 = vunpack.c.l.b16 %v342
    %v375 = vunpack.c.l.b16 %v343
    %v376 = vunpack.c.l.b16 %v344
    %v377 = vunpack.c.l.b16 %v345
    %v378 = vunpack.c.l.b16 %v346
    %v379 = vunpack.c.l.b16 %v347
    %v380 = vunpack.c.l.b16 %v348
    %v381 = vunpack.c.l.b16 %v349
    %v382 = vunpack.c.l.b16 %v350
    %v383 = vunpack.c.l.b16 %v351
    %v384 = vunpack.c.l.b16 %v352
    %v385 = vunpack.c.l.b16 %v353
    %v386 = vunpack.c.l.b16 %v354
    %v387 = vunpack.c.l.b16 %v355
    %v388 = vunpack.c.l.b16 %v356
    %v389 = vpack.c.b16 %v374, %v373
    %v390 = vpack.c.b16 %v376, %v375
    %v391 = vpack.c.b16 %v378, %v377
    %v392 = vpack.c.b16 %v380, %v379
    %v393 = vpack.c.b16 %v382, %v381
    %v394 = vpack.c.b16 %v384, %v383
    %v395 = vpack.c.b16 %v386, %v385
    %v396 = vpack.c.b16 %v388, %v387
    %405 = vmatpush.bf16.msra.mxu0 %v396
    %406 = vmatpush.bf16.msra.mxu0 %v395
    %407 = vmatpush.bf16.msra.mxu0 %v394
    %408 = vmatpush.bf16.msra.mxu0 %v393
    %409 = vmatpush.bf16.msra.mxu0 %v392
    %410 = vmatpush.bf16.msra.mxu0 %v391
    %411 = vmatpush.bf16.msra.mxu0 %v390
    %412 = vmatpush.bf16.msra.mxu0 %v389
    %413 = vmatmul.bf16.gmra.mxu0 %v339
    %v414 = vpop.f32.mrf.mxu0
    %v415 = vadd.f32 0.0, %v414
    %v416 = vpop.f32.mrf.mxu0
    %v417 = vadd.f32 0.0, %v416
    %418 = vmatmul.bf16.gmra.mxu0 %v340
    %v419 = vpop.f32.mrf.mxu0
    %v420 = vadd.f32 0.0, %v419
    %v421 = vpop.f32.mrf.mxu0
    %v422 = vadd.f32 0.0, %v421
    %423 = vdwg.mxu0
    %v424 = vadd.f32 %v260, %v415
    %v425 = vadd.f32 %v262, %v417
    %v426 = vadd.f32 %v265, %v420
    %v427 = vadd.f32 %v267, %v422
    %v428 = vmax.f32 %v424, 0.0
    %v429 = vmax.f32 %v425, 0.0
    %v430 = vmax.f32 %v426, 0.0
    %v431 = vmax.f32 %v427, 0.0
    %v432 = vpack.c.bf16 %v428, %v428
    %v433 = vpack.c.bf16 %v429, %v429
    %v434 = vpack.c.bf16 %v430, %v430
    %v435 = vpack.c.bf16 %v431, %v431
    %v438 = vunpack.c.l.b16 %v432
    %v439 = vunpack.c.l.b16 %v433
    %v440 = vpack.c.b16 %v439, %v438
    %442 = vmatpush.bf16.msra.mxu0 0
    %443 = vmatpush.bf16.msra.mxu0 0
    %444 = vmatpush.bf16.msra.mxu0 0
    %445 = vmatpush.bf16.msra.mxu0 0
    %446 = vmatpush.bf16.msra.mxu0 0
    %447 = vmatpush.bf16.msra.mxu0 0
    %448 = vmatpush.bf16.msra.mxu0 0
    %449 = vmatpush.bf16.msra.mxu0 %v440
    %450 = vmatmul.bf16.gmra.mxu0 %v292
    %v451 = vpop.f32.mrf.mxu0
    %v452 = vadd.f32 0.0, %v451
    %v453 = vpop.f32.mrf.mxu0
    %v454 = vadd.f32 0.0, %v453
    %455 = vdwg.mxu0
    %v458 = vunpack.c.l.b16 %v434
    %v459 = vunpack.c.l.b16 %v435
    %v460 = vpack.c.b16 %v459, %v458
    %462 = vmatpush.bf16.msra.mxu0 0
    %463 = vmatpush.bf16.msra.mxu0 0
    %464 = vmatpush.bf16.msra.mxu0 0
    %465 = vmatpush.bf16.msra.mxu0 0
    %466 = vmatpush.bf16.msra.mxu0 0
    %467 = vmatpush.bf16.msra.mxu0 0
    %468 = vmatpush.bf16.msra.mxu0 0
    %469 = vmatpush.bf16.msra.mxu0 %v460
    %470 = vmatmul.bf16.gmra.mxu0 %v323
    %v471 = vpop.f32.mrf.mxu0
    %v472 = vadd.f32 0.0, %v471
    %v473 = vpop.f32.mrf.mxu0
    %v474 = vadd.f32 0.0, %v473
    %475 = vdwg.mxu0
    %v476 = vpack.c.bf16 %v454, %v452
    %v477 = vpack.c.bf16 %v474, %v472
    %478 = vmatpush.bf16.msra.mxu0 %v396
    %479 = vmatpush.bf16.msra.mxu0 %v395
    %480 = vmatpush.bf16.msra.mxu0 %v394
    %481 = vmatpush.bf16.msra.mxu0 %v393
    %482 = vmatpush.bf16.msra.mxu0 %v392
    %483 = vmatpush.bf16.msra.mxu0 %v391
    %484 = vmatpush.bf16.msra.mxu0 %v390
    %485 = vmatpush.bf16.msra.mxu0 %v389
    %486 = vmatmul.bf16.gmra.mxu0 %v476
    %v487 = vpop.f32.mrf.mxu0
    %v488 = vadd.f32 0.0, %v487
    %v489 = vpop.f32.mrf.mxu0
    %v490 = vadd.f32 0.0, %v489
    %491 = vmatmul.bf16.gmra.mxu0 %v477
    %v492 = vpop.f32.mrf.mxu0
    %v493 = vadd.f32 0.0, %v492
    %v494 = vpop.f32.mrf.mxu0
    %v495 = vadd.f32 0.0, %v494
    %496 = vdwg.mxu0
    %v497 = vadd.f32 %v260, %v488
    %v498 = vadd.f32 %v262, %v490
    %v499 = vadd.f32 %v265, %v493
    %v500 = vadd.f32 %v267, %v495
    %v501 = vmax.f32 %v497, 0.0
    %v502 = vmax.f32 %v498, 0.0
    %v503 = vmax.f32 %v499, 0.0
    %v504 = vmax.f32 %v500, 0.0
    %v505 = vpack.c.bf16 %v501, %v501
    %v506 = vpack.c.bf16 %v502, %v502
    %v507 = vpack.c.bf16 %v503, %v503
    %v508 = vpack.c.bf16 %v504, %v504
    %v509 = vld [vmem:[#allocation9] sm:$0xf]
    %v512 = vunpack.c.l.b16 %v505
    %v513 = vunpack.c.l.b16 %v506
    %v514 = vpack.c.b16 %v513, %v512
    %v517 = vsel %vm290, %v509, 0
    %519 = vmatpush.bf16.msra.mxu0 0
    %520 = vmatpush.bf16.msra.mxu0 0
    %521 = vmatpush.bf16.msra.mxu0 0
    %522 = vmatpush.bf16.msra.mxu0 0
    %523 = vmatpush.bf16.msra.mxu0 0
    %524 = vmatpush.bf16.msra.mxu0 0
    %525 = vmatpush.bf16.msra.mxu0 0
    %526 = vmatpush.bf16.msra.mxu0 %v514
    %527 = vmatmul.bf16.gmra.mxu0 %v517
    %v528 = vpop.f32.mrf.mxu0
    %v529 = vadd.f32 0.0, %v528
    %v530 = vpop.f32.mrf.mxu0
    %531 = vdwg.mxu0
    %s532 = scalar_lea.vmem [#allocation9], 4
    %v533 = vld [vmem:[%s532] sm:$0xf]
    %v536 = vunpack.c.l.b16 %v507
    %v537 = vunpack.c.l.b16 %v508
    %v538 = vpack.c.b16 %v537, %v536
    %v541 = vsel %vm290, %v533, 0
    %543 = vmatpush.bf16.msra.mxu0 0
    %544 = vmatpush.bf16.msra.mxu0 0
    %545 = vmatpush.bf16.msra.mxu0 0
    %546 = vmatpush.bf16.msra.mxu0 0
    %547 = vmatpush.bf16.msra.mxu0 0
    %548 = vmatpush.bf16.msra.mxu0 0
    %549 = vmatpush.bf16.msra.mxu0 0
    %550 = vmatpush.bf16.msra.mxu0 %v538
    %551 = vmatmul.bf16.gmra.mxu0 %v541
    %v552 = vpop.f32.mrf.mxu0
    %v553 = vadd.f32 0.0, %v552
    %v554 = vpop.f32.mrf.mxu0
    %555 = vdwg.mxu0
    %v556 = vld [vmem:[#allocation4] sm:$0xf]
    %s557 = scalar_lea.vmem [#allocation4], 4
    %v558 = vld [vmem:[%s557] sm:$0xf]
    %v560 = vunpack.c.l.b16 %v558
    %v561 = vpack.c.b16 %v560, %v560
    %vm562 = vcmask 1043456
    %v565 = vsel %vm562, %v556, %v561
    %v567 = vld [vmem:[#allocation15] sm:$0xf]
    %v568 = vld [vmem:[#allocation15 + $0x4] sm:$0xf]
    %v569 = vld [vmem:[#allocation15 + $0x8] sm:$0xf]
    %v570 = vld [vmem:[#allocation15 + $0xc] sm:$0xf]
    %v571 = vld [vmem:[#allocation15 + $0x10] sm:$0xf]
    %v572 = vld [vmem:[#allocation15 + $0x14] sm:$0xf]
    %v573 = vld [vmem:[#allocation15 + $0x18] sm:$0xf]
    %v574 = vld [vmem:[#allocation15 + $0x1c] sm:$0xf]
    %v575 = vld [vmem:[#allocation15 + $0x20] sm:$0xf]
    %v576 = vld [vmem:[#allocation15 + $0x24] sm:$0xf]
    %v577 = vld [vmem:[#allocation15 + $0x28] sm:$0xf]
    %v578 = vld [vmem:[#allocation15 + $0x2c] sm:$0xf]
    %v579 = vld [vmem:[#allocation15 + $0x30] sm:$0xf]
    %v580 = vld [vmem:[#allocation15 + $0x34] sm:$0xf]
    %v581 = vld [vmem:[#allocation15 + $0x38] sm:$0xf]
    %v582 = vld [vmem:[#allocation15 + $0x3c] sm:$0xf]
    %v583 = vpack.c.bf16 %v553, %v529
    %v584 = vld [vmem:[#allocation16] sm:$0xf]
    %v585 = vld [vmem:[#allocation16 + $0x4] sm:$0xf]
    %v586 = vld [vmem:[#allocation16 + $0x8] sm:$0xf]
    %v587 = vld [vmem:[#allocation16 + $0xc] sm:$0xf]
    %v588 = vld [vmem:[#allocation16 + $0x10] sm:$0xf]
    %v589 = vld [vmem:[#allocation16 + $0x14] sm:$0xf]
    %v590 = vld [vmem:[#allocation16 + $0x18] sm:$0xf]
    %v591 = vld [vmem:[#allocation16 + $0x1c] sm:$0xf]
    %v592 = vld [vmem:[#allocation16 + $0x20] sm:$0xf]
    %v593 = vld [vmem:[#allocation16 + $0x24] sm:$0xf]
    %v594 = vld [vmem:[#allocation16 + $0x28] sm:$0xf]
    %v595 = vld [vmem:[#allocation16 + $0x2c] sm:$0xf]
    %v596 = vld [vmem:[#allocation16 + $0x30] sm:$0xf]
    %v597 = vld [vmem:[#allocation16 + $0x34] sm:$0xf]
    %v598 = vld [vmem:[#allocation16 + $0x38] sm:$0xf]
    %v599 = vld [vmem:[#allocation16 + $0x3c] sm:$0xf]
    %v616 = vunpack.c.l.b16 %v584
    %v617 = vunpack.c.l.b16 %v585
    %v618 = vunpack.c.l.b16 %v586
    %v619 = vunpack.c.l.b16 %v587
    %v620 = vunpack.c.l.b16 %v588
    %v621 = vunpack.c.l.b16 %v589
    %v622 = vunpack.c.l.b16 %v590
    %v623 = vunpack.c.l.b16 %v591
    %v624 = vunpack.c.l.b16 %v592
    %v625 = vunpack.c.l.b16 %v593
    %v626 = vunpack.c.l.b16 %v594
    %v627 = vunpack.c.l.b16 %v595
    %v628 = vunpack.c.l.b16 %v596
    %v629 = vunpack.c.l.b16 %v597
    %v630 = vunpack.c.l.b16 %v598
    %v631 = vunpack.c.l.b16 %v599
    %v632 = vpack.c.b16 %v617, %v616
    %v633 = vpack.c.b16 %v619, %v618
    %v634 = vpack.c.b16 %v621, %v620
    %v635 = vpack.c.b16 %v623, %v622
    %v636 = vpack.c.b16 %v625, %v624
    %v637 = vpack.c.b16 %v627, %v626
    %v638 = vpack.c.b16 %v629, %v628
    %v639 = vpack.c.b16 %v631, %v630
    %648 = vmatpush.bf16.msra.mxu0 %v639
    %649 = vmatpush.bf16.msra.mxu0 %v638
    %650 = vmatpush.bf16.msra.mxu0 %v637
    %651 = vmatpush.bf16.msra.mxu0 %v636
    %652 = vmatpush.bf16.msra.mxu0 %v635
    %653 = vmatpush.bf16.msra.mxu0 %v634
    %654 = vmatpush.bf16.msra.mxu0 %v633
    %655 = vmatpush.bf16.msra.mxu0 %v632
    %656 = vmatmul.bf16.gmra.mxu0 %v583
    %v657 = vpop.f32.mrf.mxu0
    %v658 = vadd.f32 0.0, %v657
    %v659 = vpop.f32.mrf.mxu0
    %v660 = vadd.f32 0.0, %v659
    %661 = vdwg.mxu0
    %v678 = vunpack.c.l.b16 %v567
    %v679 = vunpack.c.l.b16 %v568
    %v680 = vunpack.c.l.b16 %v569
    %v681 = vunpack.c.l.b16 %v570
    %v682 = vunpack.c.l.b16 %v571
    %v683 = vunpack.c.l.b16 %v572
    %v684 = vunpack.c.l.b16 %v573
    %v685 = vunpack.c.l.b16 %v574
    %v686 = vunpack.c.l.b16 %v575
    %v687 = vunpack.c.l.b16 %v576
    %v688 = vunpack.c.l.b16 %v577
    %v689 = vunpack.c.l.b16 %v578
    %v690 = vunpack.c.l.b16 %v579
    %v691 = vunpack.c.l.b16 %v580
    %v692 = vunpack.c.l.b16 %v581
    %v693 = vunpack.c.l.b16 %v582
    %v694 = vpack.c.b16 %v679, %v678
    %v695 = vpack.c.b16 %v681, %v680
    %v696 = vpack.c.b16 %v683, %v682
    %v697 = vpack.c.b16 %v685, %v684
    %v698 = vpack.c.b16 %v687, %v686
    %v699 = vpack.c.b16 %v689, %v688
    %v700 = vpack.c.b16 %v691, %v690
    %v701 = vpack.c.b16 %v693, %v692
    %710 = vmatpush.bf16.msra.mxu0 %v701
    %711 = vmatpush.bf16.msra.mxu0 %v700
    %712 = vmatpush.bf16.msra.mxu0 %v699
    %713 = vmatpush.bf16.msra.mxu0 %v698
    %714 = vmatpush.bf16.msra.mxu0 %v697
    %715 = vmatpush.bf16.msra.mxu0 %v696
    %716 = vmatpush.bf16.msra.mxu0 %v695
    %717 = vmatpush.bf16.msra.mxu0 %v694
    %718 = vmatmul.bf16.gmra.mxu0 %v565
    %v719 = vpop.f32.mrf.mxu0
    %v720 = vadd.f32 %v658, %v719
    %v721 = vpop.f32.mrf.mxu0
    %v722 = vadd.f32 %v660, %v721
    %723 = vdwg.mxu0
    %v724 = vld [vmem:[%s9] sm:$0x1]
    %v726 = vperm.slane %v724, 0
    %v728 = vadd.f32 %v720, %v726
    %v729 = vadd.f32 %v722, %v726
    %v730 = vmax.f32 %v728, 0.0
    %v731 = vmax.f32 %v729, 0.0
    %v732 = vlaneseq
    %v733 = vshrl.u32 %v732, 7
    %s734 = smul.u32 %s168, 128
    %s735 = sld [smem:[#allocation3 + %s734]]
    %v736 = vstv %s735
    %vm737 = vcmp.lt.s32.totalorder %v733, %v736
    %v738 = vsel %vm737, 1, 0
    %v739 = vcvt.s32.f32 %v738
    %p740 = scmp.gt.s32.totalorder %s735, 1
    %s741 = scalar_select %p740, %s735, 1
    %s742 = scvt.s32.f32 %s741
    %v743 = vmul.f32 %v730, %v739
    %v744 = vrot.slane %v743, 4
    %v745 = vadd.f32 %v743, %v744
    %v746 = vrot.slane %v745, 2
    %v747 = vadd.f32 %v745, %v746
    %v748 = vrot.slane %v747, 1
    %v749 = vadd.f32 %v747, %v748
    %v750 = vstv %s742
    %v751 = vrcp.pop %v750
    %v752 = vmul.f32 %v750, %v751
    %v753 = vsub.f32 1.0, %v752
    %v754 = vmul.f32 %v751, %v753
    %v755 = vadd.f32 %v751, %v754
    %vm756 = vweird.f32 %v750
    %vm757 = vweird.f32 %v751
    %vm758 = vmor %vm756, %vm757
    %v759 = vsel %vm758, %v751, %v755
    %v760 = vand.u32 2147483647, %v750
    %vm761 = vcmp.eq.f32.partialorder %v760, 8.507059e+37
    %v762 = vand.u32 %v750, 2147483648
    %v763 = vor.u32 1.1754944e-38, %v762
    %v764 = vsel %vm761, %v763, %v759
    %s765 = vtos %v764
    %v766 = vstv %s765
    %v767 = vmul.f32 %v749, %v766
    %s768 = sadd.s32 %s168, 1
    %s769 = smul.u32 %s768, 128
    %s770 = sld [smem:[#allocation3 + %s769]]
    %v771 = vstv %s770
    %vm772 = vcmp.lt.s32.totalorder %v733, %v771
    %v773 = vsel %vm772, 1, 0
    %v774 = vcvt.s32.f32 %v773
    %p775 = scmp.gt.s32.totalorder %s770, 1
    %s776 = scalar_select %p775, %s770, 1
    %s777 = scvt.s32.f32 %s776
    %v778 = vmul.f32 %v731, %v774
    %v779 = vrot.slane %v778, 4
    %v780 = vadd.f32 %v778, %v779
    %v781 = vrot.slane %v780, 2
    %v782 = vadd.f32 %v780, %v781
    %v783 = vrot.slane %v782, 1
    %v784 = vadd.f32 %v782, %v783
    %v785 = vstv %s777
    %v786 = vrcp.pop %v785
    %v787 = vmul.f32 %v785, %v786
    %v788 = vsub.f32 1.0, %v787
    %v789 = vmul.f32 %v786, %v788
    %v790 = vadd.f32 %v786, %v789
    %vm791 = vweird.f32 %v785
    %vm792 = vweird.f32 %v786
    %vm793 = vmor %vm791, %vm792
    %v794 = vsel %vm793, %v786, %v790
    %v795 = vand.u32 2147483647, %v785
    %vm796 = vcmp.eq.f32.partialorder %v795, 8.507059e+37
    %v797 = vand.u32 %v785, 2147483648
    %v798 = vor.u32 1.1754944e-38, %v797
    %v799 = vsel %vm796, %v798, %v794
    %s800 = vtos %v799
    %v801 = vstv %s800
    %v802 = vmul.f32 %v784, %v801
    %vm803 = vcmask 1040384
    %v804 = vsel %vm803, %v767, %v802
    %805 = vst [vmem:[#allocation18] sm:$0x3] %v804
    // Predicated region
    $region70: #{tpu_custom_call.1} parent=1 // pred_check
      _
    $region71: #{tpu_custom_call.1} parent=1 // pred_check_branch
      %807 = sbr.rel (0) target = $region73
    $region72: #{tpu_custom_call.1} parent=1 // pred_region
      %809 = vsyncadd [#allocation6], 0
      %s811 = sshll.u32 [#allocation18], 4
      %s812 = int_to_ptr.vmem [resolvable:$true] %s811
      %s813 = sshll.u32 %s10, 4
      %s814 = int_to_ptr.hbm [resolvable:$true] %s813
      %816 = dma.vmem_to_hbm [thread:$0]  %s812, 32, %s814, [#allocation6]
    $region73: #{tpu_custom_call.1} parent=1 // pred_fallthru
      _
    // Predicated region
    $region74: #{tpu_custom_call.1} parent=1 // pred_check
      _
    $region75: #{tpu_custom_call.1} parent=1 // pred_check_branch
      %818 = sbr.rel (0) target = $region77
    $region76: #{tpu_custom_call.1} parent=1 // pred_region
      %820 = dma.done [#allocation6], 32
    $region77: #{tpu_custom_call.1} parent=1 // pred_fallthru
      _
    %821 = vsyncpa [#allocation5], 1
    %822 = vsyncpa [#allocation8], 1
    %823 = vsyncpa [#allocation11], 1
    %824 = vsyncpa [#allocation14], 1
    %825 = vsyncpa [#allocation17], 1
    %826 = vsyncpa [#allocation6], 1

</llo_original>
